<compile_context>
chip_gen: v5e
topology: v5e:2x2
jax: 0.10.0
libtpu: 0.0.40
codegen_flags: <defaults>
</compile_context>

<pallas_src>
import functools

import jax
import jax.numpy as jnp
from jax.experimental import pallas as pl
from jax.experimental.pallas import tpu as pltpu

_LANE = 128
_MIN_PALLAS_BYTES = 1 << 20      # below this, jnp.mean (XLA fusion) wins
_MIN_CONTIG_BYTES = 2048         # min contiguous bytes per row when chunking columns


def _round_up(x: int, m: int) -> int:
    return ((x + m - 1) // m) * m


def _round_down(x: int, m: int) -> int:
    return (x // m) * m


def _sublanes(dtype) -> int:
    # f32 -> 8, bf16/f16 -> 16, int8/fp8 -> 32 (sub-32-bit packs along sublanes)
    return max(8, 32 // jnp.dtype(dtype).itemsize)


def _chip_params():
    """(target_block_bytes, parallel_cores), generation-gated.

    v5e: 4 MiB blocks (8 MiB double-buffered, fits 16 MiB scoped-VMEM default).
    v6e: 8 MiB blocks (16 MiB double-buffered, fits 32 MiB default).
    v7x: 8 MiB blocks + 2 TensorCores (shard the 'parallel' row axis).
    v4/v5p megacore: 2 TensorCores.
    Unknown: conservative 4 MiB / 1 core.
    """
    block_bytes, cores = 4 << 20, 1
    try:
        kind = jax.devices()[0].device_kind.lower()
    except Exception:
        return block_bytes, cores
    if "v6" in kind:
        block_bytes = 8 << 20
    if "v4" in kind or "v5p" in kind:
        cores = 2
    if "7" in kind:                      # v7x
        block_bytes, cores = 8 << 20, 2
    return block_bytes, cores


def _gap_kernel_single(x_ref, o_ref, *, inv):
    """col_grid == 1: the full H*W extent is resident for this row block."""
    o_ref[...] = (
        jnp.sum(x_ref[...], axis=-1, dtype=jnp.float32, keepdims=True) * inv
    ).astype(o_ref.dtype)


def _gap_kernel_multi(x_ref, o_ref, acc_ref, *, inv, valid_last_cols):
    """col_grid > 1: accumulate partial sums over the H*W grid axis (P3)."""
    k = pl.program_id(1)
    last = pl.num_programs(1) - 1

    @pl.when(k == 0)
    def _init():
        acc_ref[...] = jnp.zeros_like(acc_ref)

    x = x_ref[...]
    if valid_last_cols is None:
        # H*W divides evenly into column blocks: no tail mask anywhere.
        acc_ref[...] += jnp.sum(x, axis=-1, dtype=jnp.float32, keepdims=True)
    else:
        # Only the final column block has out-of-range lanes: mask it there and
        # keep every other step a plain (cheaper) sum.
        @pl.when(k != last)
        def _body():
            acc_ref[...] += jnp.sum(x, axis=-1, dtype=jnp.float32, keepdims=True)

        @pl.when(k == last)
        def _tail():
            col = jax.lax.broadcasted_iota(jnp.int32, x.shape, 1)
            xm = jnp.where(col < valid_last_cols, x, jnp.zeros_like(x))
            acc_ref[...] += jnp.sum(xm, axis=-1, dtype=jnp.float32, keepdims=True)

    @pl.when(k == last)
    def _finish():
        o_ref[...] = (acc_ref[...] * inv).astype(o_ref.dtype)


def _gap_pallas(feat: jax.Array, *, tile_rows=None, tile_cols=None) -> jax.Array:
    """Global average pooling over the spatial dims of an NCHW tensor -> (N, C)."""
    N, C, H, W = feat.shape
    NC, HW = N * C, H * W
    dtype = feat.dtype
    itemsize = jnp.dtype(dtype).itemsize
    sub = _sublanes(dtype)
    block_bytes, cores = _chip_params()

    # Lane-dense 2-D view of the contiguous NCHW buffer (free; wrapper-side).
    x2d = feat.reshape(NC, HW)

    # ---- reduction (column) tiling: keep the full H*W extent resident if a
    # sublane-high block fits the budget, else chop into 128-aligned chunks of
    # at least ~2 KiB contiguous bytes per row.
    min_cols = min(HW, _round_up(max(_LANE, _MIN_CONTIG_BYTES // itemsize), _LANE))
    if tile_cols is None:
        budget_cols = block_bytes // (sub * itemsize)
        if budget_cols >= HW:
            tile_cols = HW
        else:
            tile_cols = max(min_cols, _round_down(budget_cols, _LANE))
    else:
        tile_cols = max(int(tile_cols), min_cols)
        tile_cols = HW if tile_cols >= HW else _round_up(tile_cols, _LANE)
    assert tile_cols == HW or tile_cols % _LANE == 0, "column tile must be lane-aligned"
    col_grid = pl.cdiv(HW, tile_cols)

    # ---- row tiling: fill the block budget, rows a multiple of the sublane
    # packing (partial edge row-blocks are fine: their writes are masked).
    if tile_rows is None:
        tile_rows = max(sub, _round_down(block_bytes // (tile_cols * itemsize), sub))
    else:
        tile_rows = max(sub, _round_up(int(tile_rows), sub))
    tile_rows = min(tile_rows, NC)
    # 2-TC parts (v7x / megacore): make sure the 'parallel' row axis has >= 2
    # blocks so both TensorCores get work.  (Tiny-NC + huge-HW shapes that
    # cannot be split by rows would need a parallel column split with a small
    # epilogue sum; not implemented — row splitting covers the common case.)
    if cores >= 2 and tile_rows >= NC and NC > sub:
        half = _round_up(pl.cdiv(NC, 2), sub)
        if half < NC:
            tile_rows = half
    assert tile_rows == NC or tile_rows % sub == 0, "row tile must be sublane-aligned"
    row_grid = pl.cdiv(NC, tile_rows)

    inv = 1.0 / float(HW)

    if col_grid == 1:
        # Specialized single-pass path: no scratch, no init/finish phases.
        kernel = functools.partial(_gap_kernel_single, inv=inv)
        out = pl.pallas_call(
            kernel,
            out_shape=jax.ShapeDtypeStruct((NC, 1), dtype),
            grid_spec=pltpu.PrefetchScalarGridSpec(
                num_scalar_prefetch=0,
                grid=(row_grid,),
                in_specs=[pl.BlockSpec((tile_rows, HW), lambda i: (i, 0))],
                out_specs=pl.BlockSpec((tile_rows, 1), lambda i: (i, 0)),
            ),
            compiler_params=pltpu.CompilerParams(
                dimension_semantics=("parallel",),
            ),
        )(x2d)
    else:
        tail = HW - (col_grid - 1) * tile_cols
        valid_last_cols = None if tail == tile_cols else tail
        kernel = functools.partial(
            _gap_kernel_multi, inv=inv, valid_last_cols=valid_last_cols)
        out = pl.pallas_call(
            kernel,
            out_shape=jax.ShapeDtypeStruct((NC, 1), dtype),
            grid_spec=pltpu.PrefetchScalarGridSpec(
                num_scalar_prefetch=0,
                grid=(row_grid, col_grid),
                in_specs=[pl.BlockSpec((tile_rows, tile_cols), lambda i, k: (i, k))],
                out_specs=pl.BlockSpec((tile_rows, 1), lambda i, k: (i, 0)),
                scratch_shapes=[pltpu.VMEM((tile_rows, 1), jnp.float32)],
            ),
            compiler_params=pltpu.CompilerParams(
                # Row tiles are independent -> shardable across TensorCores.
                # The H*W axis carries the accumulator -> "arbitrary".
                dimension_semantics=("parallel", "arbitrary"),
            ),
        )(x2d)

    return out.reshape(N, C)


def global_average_pooling(feat: jax.Array) -> jax.Array:
    """Forward of GlobalAveragePooling: F.avg_pool2d(feat, (H, W)).view(-1, C)."""
    if feat.size * jnp.dtype(feat.dtype).itemsize < _MIN_PALLAS_BYTES:
        # Tiny activations: pallas_call launch + per-step overhead dominates;
        # XLA's fused reduction is faster.
        return jnp.mean(feat, axis=(2, 3))
    return _gap_pallas(feat)


if __name__ == "__main__":
    key = jax.random.PRNGKey(0)
    k1, k2 = jax.random.split(key)

    # Primary test: shape consistent with the PyTorch module's conv features.
    x = jax.random.normal(k1, (2, 4, 16, 16), dtype=jnp.float32)
    out = jax.block_until_ready(_gap_pallas(x))
    ref = jnp.mean(x, axis=(2, 3))
    assert out.shape == (2, 4), out.shape
    assert jnp.allclose(out, ref, atol=1e-5, rtol=1e-5), "mismatch vs reference"

    # Multi-block path: forced small tiles exercise row tiling, the reduction
    # grid axis (accumulator), and the last-block column mask (576 % 512 != 0).
    x2 = jax.random.normal(k2, (2, 8, 24, 24), dtype=jnp.float32)
    out2 = jax.block_until_ready(_gap_pallas(x2, tile_rows=8, tile_cols=512))
    ref2 = jnp.mean(x2, axis=(2, 3))
    assert jnp.allclose(out2, ref2, atol=1e-5, rtol=1e-5), "tiled mismatch"

    # bf16 inputs: bf16 loads, f32 accumulation.
    xb = x.astype(jnp.bfloat16)
    outb = jax.block_until_ready(_gap_pallas(xb))
    refb = jnp.mean(xb.astype(jnp.float32), axis=(2, 3))
    assert jnp.allclose(outb.astype(jnp.float32), refb, atol=2e-2, rtol=2e-2)

    # Dispatcher (tiny-input fallback) matches too.
    outd = jax.block_until_ready(global_average_pooling(x))
    assert jnp.allclose(outd, ref, atol=1e-5, rtol=1e-5)

    print("KERNEL_OK")
</pallas_src>

<mosaic_0001>
module attributes {stable_mosaic.version = 11 : i64} {
  func.func @_gap_kernel_single(%arg0: i32, %arg1: memref<8x256xf32, #tpu.memory_space<vmem>>, %arg2: memref<8x1xf32, #tpu.memory_space<vmem>>) attributes {dimension_semantics = [#tpu.dimension_semantics<parallel>], iteration_bounds = array<i64: 1>, scalar_prefetch = 0 : i64, scratch_operands = 0 : i64, tpu.core_type = #tpu.core_type<tc>, window_params = [{transform_indices = @transform_0, window_bounds = array<i64: 8, 256>}, {transform_indices = @transform_1, window_bounds = array<i64: 8, 1>}]} {
    %c0 = arith.constant 0 : index
    %c0_0 = arith.constant 0 : index
    %0 = vector.load %arg1[%c0, %c0_0] : memref<8x256xf32, #tpu.memory_space<vmem>>, vector<8x256xf32>
    %cst = arith.constant dense<0.000000e+00> : vector<8xf32>
    %1 = vector.multi_reduction <add>, %0, %cst [1] : vector<8x256xf32> to vector<8xf32>
    %2 = vector.shape_cast %1 : vector<8xf32> to vector<8x1xf32>
    %cst_1 = arith.constant 3.906250e-03 : f32
    %3 = vector.broadcast %cst_1 : f32 to vector<8x1xf32>
    %4 = arith.mulf %2, %3 : vector<8x1xf32>
    %c0_2 = arith.constant 0 : index
    %c0_3 = arith.constant 0 : index
    %5 = vector.load %arg2[%c0_2, %c0_3] : memref<8x1xf32, #tpu.memory_space<vmem>>, vector<8x1xf32>
    tpu.vector_store %arg2[%c0_2, %c0_3], %4 {strides = array<i32>} : memref<8x1xf32, #tpu.memory_space<vmem>>, vector<8x1xf32>,
    return
  }
  func.func @transform_0(%arg0: i32) -> (i32, i32) {
    %c0_i32 = arith.constant 0 : i32
    %c0_i32_0 = arith.constant 0 : i32
    return %arg0, %c0_i32 : i32, i32
  }
  func.func @transform_1(%arg0: i32) -> (i32, i32) {
    %c0_i32 = arith.constant 0 : i32
    %c0_i32_0 = arith.constant 0 : i32
    return %arg0, %c0_i32 : i32, i32
  }
}

</mosaic_0001>

<llo_original>
// kernel: tpu_custom_call.1
$region0: #{tpu_custom_call.1}
  #allocation0 [shape = 'u32[]', space=smem, size = 0x4, offset = 0x4, fixed_abs, tag = 'smem constant byte address 0x4 - core index']
  #allocation1 [shape = 'u32[72,128]{1,0:T(1,128)}', space=vmem, size = 0x9000, scoped, tag = 'internal scratch']
  %s0 = inlined_call_operand.hbm [shape: f32[8,256], index: 0, kind: input, shape index: {}]
  %s1 = inlined_call_operand.vmem [shape: f32[8,1], index: 1, kind: output, shape index: {}]
  %s2 = sld [smem:[#allocation0]]
  $region18: #{tpu_custom_call.1} parent=0
    _
  %s4 = ssub.s32 1, %s2
  %s5 = scalar_select 0, %s4, %s2
  $region1: #{tpu_custom_call.1} parent=0
    #allocation2 [shape = 'u8[8192]{0}', space=vmem, size = 0x2000, scoped, tag = 'input window, operand 0, single buffered']
    #allocation3 [shape = 's32[1]{0}', space=sflag, size = 0x4, scoped, tag = 'scoped memory for tpu_custom_call.1']
    %6 = vsyncpa [#allocation3], 0
    // Predicated region
    $region2: #{tpu_custom_call.1} parent=1 // pred_check
      _
    $region3: #{tpu_custom_call.1} parent=1 // pred_check_branch
      %8 = sbr.rel (0) target = $region5
    $region4: #{tpu_custom_call.1} parent=1 // pred_region
      %10 = vsyncadd [#allocation3], 0
      %s12 = sshll.u32 %s0, 4
      %s13 = int_to_ptr.hbm [resolvable:$true] %s12
      %s14 = sshll.u32 [#allocation2], 4
      %s15 = int_to_ptr.vmem [resolvable:$true] %s14
      %17 = dma.hbm_to_vmem [thread:$0]  %s13, 256, %s15, [#allocation3]
    $region5: #{tpu_custom_call.1} parent=1 // pred_fallthru
      _
    // Predicated region
    $region6: #{tpu_custom_call.1} parent=1 // pred_check
      _
    $region7: #{tpu_custom_call.1} parent=1 // pred_check_branch
      %19 = sbr.rel (0) target = $region9
    $region8: #{tpu_custom_call.1} parent=1 // pred_region
      %21 = dma.done [#allocation3], 256
    $region9: #{tpu_custom_call.1} parent=1 // pred_fallthru
      _
    %v22 = vld [vmem:[#allocation2] sm:$0xff]
    %v23 = vld [vmem:[#allocation2 + $0x8] sm:$0xff]
    %v24 = vadd.f32 %v22, %v23
    %25 = vadd.xlane.f32.xlu0 %v24
    %v26 = vpop.xlane.xlu0 %25
    %v27 = vmul.f32 %v26, 0.00390625
    %vm28 = vcmask 7168
    %29 = vst.msk [vmem:[%s1] sm:$0xff] %vm28, %v27
    // Predicated region
    $region10: #{tpu_custom_call.1} parent=1 // pred_check
      _
    $region11: #{tpu_custom_call.1} parent=1 // pred_check_branch
      %31 = sbr.rel (0) target = $region13
    $region12: #{tpu_custom_call.1} parent=1 // pred_region
      _
    $region13: #{tpu_custom_call.1} parent=1 // pred_fallthru
      _
    // Predicated region
    $region14: #{tpu_custom_call.1} parent=1 // pred_check
      _
    $region15: #{tpu_custom_call.1} parent=1 // pred_check_branch
      %33 = sbr.rel (0) target = $region17
    $region16: #{tpu_custom_call.1} parent=1 // pred_region
      _
    $region17: #{tpu_custom_call.1} parent=1 // pred_fallthru
      _
    %34 = vsyncpa [#allocation3], 1

</llo_original>
